<compile_context>
chip_gen: v7x
topology: tpu7x:2x2x1
jax: 0.10.0
libtpu: 0.0.40
codegen_flags: <defaults>
</compile_context>

<pallas_src>
import functools

import jax
import jax.numpy as jnp
from jax.experimental import pallas as pl
from jax.experimental.pallas import tpu as pltpu

LANES = 128
VMEM_SPEC = pl.BlockSpec(memory_space=pltpu.MemorySpace.VMEM)
_MEGACORE = pltpu.CompilerParams(dimension_semantics=("parallel", "parallel"))
_EPS = 1e-5


# ----------------------------------------------------------------------------
# Small helpers
# ----------------------------------------------------------------------------
def _rup(c, m=LANES):
    return ((c + m - 1) // m) * m


def _pick_row_tile(ho, wo, target_rows=512):
    """Smallest divisor TH of `ho` whose (TH*wo) matmul-M dim is well filled
    (>= target_rows) and 8-sublane aligned; small images use the full height
    (full blocks carry no alignment constraint)."""
    if ho * wo <= 2 * target_rows:
        return ho
    for t in range(1, ho + 1):
        if ho % t == 0 and t * wo >= target_rows and (t * wo) % 8 == 0:
            return t
    return ho


def _pick_m_tile(m, target=512):
    """Divisor of m in [target, 2*target] that is 8-aligned, else the full m."""
    if m <= 2 * target:
        return m
    for t in range(target, 2 * target + 1):
        if m % t == 0 and t % 8 == 0:
            return t
    return m


def _full_spec(shape):
    nd = len(shape)
    return pl.BlockSpec(shape, lambda *_: (0,) * nd)


def _plane_spec(arr):
    # Whole (padded) image per batch item; the block index ignores the
    # row-tile grid axis so Pallas keeps it VMEM-resident across row tiles
    # (one DMA per image per layer).  ~3.3 MB worst case at 224x224, well
    # under every chip's scoped-VMEM default.
    # TODO(synk): at very large resolutions switch to row-tiled halo blocks
    # (pl.Element row offsets) so VMEM use scales with the tile, not the image.
    return pl.BlockSpec((1,) + arr.shape[1:], lambda n, r: (n, 0, 0, 0))


# ----------------------------------------------------------------------------
# Pallas kernels
# ----------------------------------------------------------------------------
def _conv1_kernel(x_ref, w_ref, b_ref, o_ref):
    # Layer 1: fused 3x3 stride-2 conv + folded BN + ReLU as ONE K-packed
    # matmul.
    #   x_ref: (1, TM, K) bf16 im2col rows (9 taps x Cin packed on K/lanes)
    #   w_ref: (K, Cout)  bf16 with BN scale folded in
    #   b_ref: (1, Cout)  f32 folded BN bias
    y = jnp.dot(x_ref[0], w_ref[...], preferred_element_type=jnp.float32)
    o_ref[0] = jnp.maximum(y + b_ref[...], 0.0).astype(o_ref.dtype)


def _pw_matmul_epilogue(pww_ref, pwb_ref, o_ref, scr_ref):
    # Pointwise 1x1 conv + bias + ReLU over the depthwise rows staged in VMEM.
    y = jnp.dot(scr_ref[...], pww_ref[...], preferred_element_type=jnp.float32)
    o_ref[0] = jnp.maximum(y + pwb_ref[...], 0.0).astype(o_ref.dtype)


def _dw_pw_s1_kernel(x_ref, dww_ref, dwb_ref, pww_ref, pwb_ref, o_ref, scr_ref,
                     *, TH, Wo, Cin):
    # Fused depthwise 3x3 (stride 1, input pre-padded by 1) + bias + ReLU,
    # followed by pointwise 1x1 + bias + ReLU (BN scales folded into weights).
    # Depthwise accumulation is per output row in vregs.
    r0 = pl.program_id(1) * TH
    w_taps = [dww_ref[t] for t in range(9)]          # 9 x (1, Cin) f32
    db = dwb_ref[...]                                # (1, Cin) f32
    for rr in range(TH):
        acc = jnp.zeros((Wo, Cin), jnp.float32)
        for dy in range(3):
            # One load + one f32 cast per (row, dy); the dx taps are
            # in-register sublane slices of the same window.
            win = x_ref[0, r0 + rr + dy].astype(jnp.float32)     # (Wo+2, Cin)
            for dx in range(3):
                acc = acc + win[dx:dx + Wo, :] * w_taps[dy * 3 + dx]
        d = jnp.maximum(acc + db, 0.0).astype(jnp.bfloat16)
        scr_ref[pl.ds(rr * Wo, Wo), :] = d
    _pw_matmul_epilogue(pww_ref, pwb_ref, o_ref, scr_ref)


def _dw_pw_s2_kernel(p00, p01, p10, p11, dww_ref, dwb_ref, pww_ref, pwb_ref,
                     o_ref, scr_ref, *, TH, Wo, Cin):
    # Stride-2 variant.  p{row parity}{col parity} are parity planes of the
    # padded input, so every stride-2 tap is a contiguous slice:
    #   dy=0 -> even rows [r], dy=1 -> odd rows [r], dy=2 -> even rows [r+1]
    #   dx=0 -> even cols [0:Wo], dx=1 -> odd cols [0:Wo], dx=2 -> even [1:Wo+1]
    r0 = pl.program_id(1) * TH
    w_taps = [dww_ref[t] for t in range(9)]
    db = dwb_ref[...]
    for rr in range(TH):
        r = r0 + rr
        acc = jnp.zeros((Wo, Cin), jnp.float32)
        for dy in range(3):
            ridx = r + dy // 2
            ev_ref, od_ref = (p00, p01) if dy % 2 == 0 else (p10, p11)
            ev = ev_ref[0, ridx].astype(jnp.float32)             # (Wo+1, Cin)
            od = od_ref[0, ridx].astype(jnp.float32)             # (>=Wo, Cin)
            acc = acc + ev[0:Wo, :] * w_taps[dy * 3 + 0]
            acc = acc + od[0:Wo, :] * w_taps[dy * 3 + 1]
            acc = acc + ev[1:Wo + 1, :] * w_taps[dy * 3 + 2]
        d = jnp.maximum(acc + db, 0.0).astype(jnp.bfloat16)
        scr_ref[pl.ds(rr * Wo, Wo), :] = d
    _pw_matmul_epilogue(pww_ref, pwb_ref, o_ref, scr_ref)


def _pool_fc_kernel(x_ref, w_ref, b_ref, o_ref):
    # AdaptiveAvgPool2d(1) + flatten + Linear, fused.  Pool in f32; matmul
    # with bf16 operands and f32 accumulation (MXU fast path).
    x = x_ref[...].astype(jnp.float32)                            # (N, H*W, C)
    pooled = jnp.mean(x, axis=1).astype(jnp.bfloat16)             # (N, C)
    y = jnp.dot(pooled, w_ref[...], preferred_element_type=jnp.float32)
    o_ref[...] = y + b_ref[...]


# ----------------------------------------------------------------------------
# Glue (pure data movement in plain JAX)
# ----------------------------------------------------------------------------
def _pad_hw(x):
    return jnp.pad(x, ((0, 0), (1, 1), (1, 1), (0, 0)))


def _parity_planes(xp):
    # Space-to-depth: even/odd row & col planes of the padded input so that
    # every stride-2 tap becomes a contiguous in-kernel slice.
    # TODO(synk): fold the pad / parity split into the previous layer's
    # writeback (or in-kernel border masking) to drop this extra XLA copy at
    # large resolutions.
    return (xp[:, 0::2, 0::2, :], xp[:, 0::2, 1::2, :],
            xp[:, 1::2, 0::2, :], xp[:, 1::2, 1::2, :])


def _im2col_s2_3x3(x):
    """3x3 / stride-2 / pad-1 im2col: (N,H,W,C) -> (N,Ho,Wo,9*C), tap-major."""
    n, h, w, c = x.shape
    ho, wo = (h + 1) // 2, (w + 1) // 2
    xp = _pad_hw(x)
    taps = [xp[:, dy:dy + 2 * ho:2, dx:dx + 2 * wo:2, :]
            for dy in range(3) for dx in range(3)]
    return jnp.concatenate(taps, axis=-1)


# ----------------------------------------------------------------------------
# Layer wrappers
# ----------------------------------------------------------------------------
def conv_bn_layer(x, p):
    """Layer 1: 3x3 conv (stride 2, pad 1) + folded BN + ReLU as one matmul."""
    n, h, w_, _ = x.shape
    ho, wo = (h + 1) // 2, (w_ + 1) // 2
    k = p["w"].shape[0]
    cout = p["w"].shape[-1]
    cols = _im2col_s2_3x3(x)                                   # (N,Ho,Wo,9*Cin)
    cols = jnp.pad(cols, ((0, 0), (0, 0), (0, 0), (0, k - cols.shape[-1])))
    m = ho * wo
    cols = cols.reshape(n, m, k)
    tm = _pick_m_tile(m)
    out = pl.pallas_call(
        _conv1_kernel,
        grid=(n, m // tm),
        in_specs=[pl.BlockSpec((1, tm, k), lambda b, r: (b, r, 0)),
                  _full_spec(p["w"].shape), _full_spec(p["bias"].shape)],
        out_specs=pl.BlockSpec((1, tm, cout), lambda b, r: (b, r, 0)),
        out_shape=jax.ShapeDtypeStruct((n, m, cout), jnp.bfloat16),
        compiler_params=_MEGACORE,
    )(cols, p["w"], p["bias"])
    return out.reshape(n, ho, wo, cout)


def conv_dw_layer(x, p):
    """conv_dw block: depthwise 3x3 + BN + ReLU -> pointwise 1x1 + BN + ReLU,
    fused into one pallas_call (the depthwise rows never leave VMEM)."""
    # TODO(synk): batch-fold M and fuse the five 512->512 stride-1 blocks for
    # the small-spatial tail (one pallas_call keeping the 7x7 activation in
    # VMEM) to cut per-call overhead and better fill the 256-wide MXU.
    n, h, w_, cin = x.shape
    cout = p["pw_w"].shape[-1]
    if p["stride"] == 1:
        ho, wo = h, w_
        ins = (_pad_hw(x),)
        body = _dw_pw_s1_kernel
    else:
        ho, wo = (h + 1) // 2, (w_ + 1) // 2
        ins = _parity_planes(_pad_hw(x))
        body = _dw_pw_s2_kernel
    th = _pick_row_tile(ho, wo)
    out = pl.pallas_call(
        functools.partial(body, TH=th, Wo=wo, Cin=cin),
        grid=(n, ho // th),
        in_specs=[_plane_spec(a) for a in ins]
                 + [_full_spec(p[key].shape)
                    for key in ("dw_w", "dw_bias", "pw_w", "pw_bias")],
        out_specs=pl.BlockSpec((1, th * wo, cout), lambda b, r: (b, r, 0)),
        out_shape=jax.ShapeDtypeStruct((n, ho * wo, cout), jnp.bfloat16),
        scratch_shapes=[pltpu.VMEM((th * wo, cin), jnp.bfloat16)],
        compiler_params=_MEGACORE,
    )(*ins, p["dw_w"], p["dw_bias"], p["pw_w"], p["pw_bias"])
    return out.reshape(n, ho, wo, cout)


def pool_fc(x, fc_w, fc_b):
    """AdaptiveAvgPool2d(1) + flatten + Linear fused in one small kernel."""
    n, h, w_, c = x.shape
    ncp = fc_w.shape[1]
    return pl.pallas_call(
        _pool_fc_kernel,
        out_shape=jax.ShapeDtypeStruct((n, ncp), jnp.float32),
        in_specs=[VMEM_SPEC, VMEM_SPEC, VMEM_SPEC],
        out_specs=VMEM_SPEC,
    )(x.reshape(n, h * w_, c), fc_w, fc_b)


# ----------------------------------------------------------------------------
# Parameter init (deterministic, synthetic; BN scale folded into weights;
# channels padded to 128)
# ----------------------------------------------------------------------------
_CFG = [
    ("conv", None, 32, 2),     # conv_bn(ch_in, 32, 2)
    ("dw", 32, 64, 1), ("dw", 64, 128, 2), ("dw", 128, 128, 1),
    ("dw", 128, 256, 2), ("dw", 256, 256, 1), ("dw", 256, 512, 2),
    ("dw", 512, 512, 1), ("dw", 512, 512, 1), ("dw", 512, 512, 1),
    ("dw", 512, 512, 1), ("dw", 512, 512, 1), ("dw", 512, 1024, 2),
    ("dw", 1024, 1024, 1),
]


def _bn_affine(key, c, cp):
    """Inference-mode BN fold with synthetic running stats (mean=0, var=1).
    Returns the (unpadded) per-channel scale to fold into the conv weight and
    the (lane-padded) bias that stays in the kernel epilogue."""
    k1, k2 = jax.random.split(key)
    gamma = 1.0 + 0.1 * jax.random.normal(k1, (c,))
    beta = 0.1 * jax.random.normal(k2, (c,))
    scale = gamma / jnp.sqrt(1.0 + _EPS)
    bias = jnp.pad(beta, (0, cp - c)).reshape(1, cp).astype(jnp.float32)
    return scale, bias


def init_params(key, ch_in, num_classes):
    layers = []
    for kind, cin, cout, stride in _CFG:
        if kind == "conv":
            cin = ch_in
            cout_p = _rup(cout)
            kp = _rup(9 * cin)
            key, kw, kbn = jax.random.split(key, 3)
            w = jax.random.normal(kw, (3, 3, cin, cout)) / jnp.sqrt(9.0 * cin)
            scale, bias = _bn_affine(kbn, cout, cout_p)
            w = (w * scale[None, None, None, :]).reshape(9 * cin, cout)
            w = jnp.pad(w, ((0, kp - 9 * cin), (0, cout_p - cout)))
            layers.append(dict(kind="conv", stride=stride,
                               w=w.astype(jnp.bfloat16), bias=bias))
        else:
            cin_p, cout_p = _rup(cin), _rup(cout)
            key, kdw, kbn1, kpw, kbn2 = jax.random.split(key, 5)
            dw_w = jax.random.normal(kdw, (3, 3, cin)) / 3.0
            dw_scale, dw_bias = _bn_affine(kbn1, cin, cin_p)
            dw_w = jnp.pad(dw_w * dw_scale[None, None, :],
                           ((0, 0), (0, 0), (0, cin_p - cin)))
            pw_w = jax.random.normal(kpw, (cin, cout)) / jnp.sqrt(float(cin))
            pw_scale, pw_bias = _bn_affine(kbn2, cout, cout_p)
            pw_w = jnp.pad(pw_w * pw_scale[None, :],
                           ((0, cin_p - cin), (0, cout_p - cout)))
            layers.append(dict(
                kind="dw", stride=stride,
                dw_w=dw_w.reshape(9, 1, cin_p).astype(jnp.float32),
                dw_bias=dw_bias,
                pw_w=pw_w.astype(jnp.bfloat16),
                pw_bias=pw_bias))
    key, kw, kb = jax.random.split(key, 3)
    nc_p = _rup(num_classes)
    fc_w = jax.random.normal(kw, (1024, num_classes)) / jnp.sqrt(1024.0)
    fc_w = jnp.pad(fc_w, ((0, 0), (0, nc_p - num_classes)))
    fc_b = 0.1 * jax.random.normal(kb, (num_classes,))
    fc_b = jnp.pad(fc_b, (0, nc_p - num_classes))
    return dict(layers=layers, num_classes=num_classes,
                fc_w=fc_w.astype(jnp.bfloat16),
                fc_b=fc_b.reshape(1, nc_p).astype(jnp.float32))


# ----------------------------------------------------------------------------
# Forward
# ----------------------------------------------------------------------------
def mobilenet_v1_forward(x_nchw, params):
    x = jnp.transpose(x_nchw, (0, 2, 3, 1)).astype(jnp.bfloat16)  # NCHW -> NHWC
    for p in params["layers"]:
        if p["kind"] == "conv":
            x = conv_bn_layer(x, p)
        else:
            x = conv_dw_layer(x, p)
    logits_p = pool_fc(x, params["fc_w"], params["fc_b"])         # [N, 128]
    return logits_p[:, :params["num_classes"]]                    # [N, classes]


if __name__ == "__main__":
    ch_in, num_classes = 4, 10
    N, H = 2, 16

    key = jax.random.PRNGKey(0)
    kx, kp = jax.random.split(key)
    x = jax.random.normal(kx, (N, ch_in, H, H), dtype=jnp.float32)  # NCHW
    params = init_params(kp, ch_in, num_classes)

    out = mobilenet_v1_forward(x, params)
    out = jax.block_until_ready(out)
    assert out.shape == (N, num_classes), out.shape
    assert bool(jnp.all(jnp.isfinite(out)))
    print("KERNEL_OK")
</pallas_src>

<mosaic_0001>
module attributes {stable_mosaic.version = 11 : i64} {
  func.func @_conv1_kernel(%arg0: i32, %arg1: i32, %arg2: memref<1x64x128xbf16, #tpu.memory_space<vmem>>, %arg3: memref<128x128xbf16, #tpu.memory_space<vmem>>, %arg4: memref<1x128xf32, #tpu.memory_space<vmem>>, %arg5: memref<1x64x128xbf16, #tpu.memory_space<vmem>>) attributes {dimension_semantics = [#tpu.dimension_semantics<parallel>, #tpu.dimension_semantics<parallel>], iteration_bounds = array<i64: 2, 1>, scalar_prefetch = 0 : i64, scratch_operands = 0 : i64, tpu.core_type = #tpu.core_type<tc>, window_params = [{transform_indices = @transform_0, window_bounds = array<i64: 1, 64, 128>}, {pipeline_mode = #tpu.pipeline_mode<synchronous>, transform_indices = @transform_1, window_bounds = array<i64: 128, 128>}, {pipeline_mode = #tpu.pipeline_mode<synchronous>, transform_indices = @transform_2, window_bounds = array<i64: 1, 128>}, {transform_indices = @transform_3, window_bounds = array<i64: 1, 64, 128>}]} {
    %c0 = arith.constant 0 : index
    %c0_0 = arith.constant 0 : index
    %c0_1 = arith.constant 0 : index
    %0 = vector.load %arg2[%c0, %c0_0, %c0_1] : memref<1x64x128xbf16, #tpu.memory_space<vmem>>, vector<1x64x128xbf16>
    %1 = vector.shape_cast %0 : vector<1x64x128xbf16> to vector<64x128xbf16>
    %c0_2 = arith.constant 0 : index
    %c0_3 = arith.constant 0 : index
    %2 = vector.load %arg3[%c0_2, %c0_3] : memref<128x128xbf16, #tpu.memory_space<vmem>>, vector<128x128xbf16>
    %cst = arith.constant dense<0.000000e+00> : vector<64x128xf32>
    %3 = tpu.matmul %1, %2, %cst {dimension_numbers = #tpu.dot_dimension_numbers<[1], [0], [0], [1], [0, 0, 1, 1], [], []>} : vector<64x128xbf16>, vector<128x128xbf16>, vector<64x128xf32> -> vector<64x128xf32>
    %c0_4 = arith.constant 0 : index
    %c0_5 = arith.constant 0 : index
    %4 = vector.load %arg4[%c0_4, %c0_5] : memref<1x128xf32, #tpu.memory_space<vmem>>, vector<1x128xf32>
    %5 = vector.broadcast %4 : vector<1x128xf32> to vector<64x128xf32>
    %6 = arith.addf %3, %5 : vector<64x128xf32>
    %cst_6 = arith.constant 0.000000e+00 : f32
    %7 = vector.broadcast %cst_6 : f32 to vector<64x128xf32>
    %8 = arith.maximumf %6, %7 : vector<64x128xf32>
    %9 = arith.truncf %8 : vector<64x128xf32> to vector<64x128xbf16>
    %c0_7 = arith.constant 0 : index
    %c0_8 = arith.constant 0 : index
    %c0_9 = arith.constant 0 : index
    %10 = vector.load %arg5[%c0_7, %c0_8, %c0_9] : memref<1x64x128xbf16, #tpu.memory_space<vmem>>, vector<1x64x128xbf16>
    %11 = vector.shape_cast %10 : vector<1x64x128xbf16> to vector<64x128xbf16>
    %12 = vector.shape_cast %9 : vector<64x128xbf16> to vector<1x64x128xbf16>
    tpu.vector_store %arg5[%c0_7, %c0_8, %c0_9], %12 {strides = array<i32>} : memref<1x64x128xbf16, #tpu.memory_space<vmem>>, vector<1x64x128xbf16>,
    return
  }
  func.func @transform_0(%arg0: i32, %arg1: i32) -> (i32, i32, i32) {
    %c0_i32 = arith.constant 0 : i32
    %c0_i32_0 = arith.constant 0 : i32
    return %arg0, %arg1, %c0_i32 : i32, i32, i32
  }
  func.func @transform_1(%arg0: i32, %arg1: i32) -> (i32, i32) {
    %c0_i32 = arith.constant 0 : i32
    %c0_i32_0 = arith.constant 0 : i32
    %c0_i32_1 = arith.constant 0 : i32
    return %c0_i32, %c0_i32_0 : i32, i32
  }
  func.func @transform_2(%arg0: i32, %arg1: i32) -> (i32, i32) {
    %c0_i32 = arith.constant 0 : i32
    %c0_i32_0 = arith.constant 0 : i32
    %c0_i32_1 = arith.constant 0 : i32
    return %c0_i32, %c0_i32_0 : i32, i32
  }
  func.func @transform_3(%arg0: i32, %arg1: i32) -> (i32, i32, i32) {
    %c0_i32 = arith.constant 0 : i32
    %c0_i32_0 = arith.constant 0 : i32
    return %arg0, %arg1, %c0_i32 : i32, i32, i32
  }
}

</mosaic_0001>

<llo_original>
// kernel: tpu_custom_call.1
$region0: #{tpu_custom_call.1}
  #allocation0 [shape = 'u32[]', space=smem, size = 0x4, offset = 0x4, fixed_abs, tag = 'smem constant byte address 0x4 - core index']
  #allocation1 [shape = 'u32[144,128]{1,0:T(1,128)}', space=vmem, size = 0x12000, scoped, tag = 'internal scratch']
  %s0 = inlined_call_operand.hbm [shape: bf16[2,64,128], index: 0, kind: input, shape index: {}]
  %s1 = inlined_call_operand.hbm [shape: bf16[128,128], index: 1, kind: input, shape index: {}]
  %s2 = inlined_call_operand.vmem [shape: f32[1,128], index: 2, kind: input, shape index: {}]
  %s3 = inlined_call_operand.hbm [shape: bf16[2,64,128], index: 3, kind: output, shape index: {}]
  %s4 = sld [smem:[#allocation0]]
  $region53: #{tpu_custom_call.1} parent=0
    _
  %s6 = ssub.s32 1, %s4
  %s7 = scalar_select 0, %s6, %s4
  $region1: #{tpu_custom_call.1} parent=0
    #allocation2 [shape = 'u8[32768]{0}', space=vmem, size = 0x8000, scoped, tag = 'input window, operand 0']
    #allocation3 [shape = 's32[2]{0}', space=sflag, size = 0x8, scoped, tag = 'scoped memory for tpu_custom_call.1']
    #allocation4 [shape = 's32[2]{0}', space=sflag, size = 0x8, scoped, tag = 'scoped memory for tpu_custom_call.1']
    #allocation5 [shape = 'u8[32768]{0}', space=vmem, size = 0x8000, scoped, tag = 'input window, operand 1, single buffered']
    #allocation6 [shape = 's32[1]{0}', space=sflag, size = 0x4, scoped, tag = 'scoped memory for tpu_custom_call.1']
    #allocation7 [shape = 'u8[32768]{0}', space=vmem, size = 0x8000, scoped, tag = 'output window, operand 0']
    %8 = vsyncpa [#allocation3], 0
    %s9 = scalar_lea.sflag [#allocation3], 1
    %10 = vsyncpa %s9, 0
    %11 = vsyncpa [#allocation6], 0
    %12 = vsyncpa [#allocation4], 0
    %s13 = scalar_lea.sflag [#allocation4], 1
    %14 = vsyncpa %s13, 0
    loop: start=0, step=1, limit=4
    $region2: #{tpu_custom_call.1} parent=1 // loop_pre_header
      _
    $region3: #{tpu_custom_call.1} parent=1 // loop_header
      %s16 = sphi 0, %s20
      %p17 = scmp.ge.s32.totalorder %s16, 4
      %s23 = sphi 0, %s35
      %s24 = sphi 0, %s31
      %s25 = sphi 0, %s23
      %s26 = sphi 0, %s24
      %s27 = sphi 0, %s25
      %s28 = sphi 0, %s26
      %s40 = sphi 0, %s42
      %s43 = sphi 0, %s40
      %s44 = sphi 0, %s43
      %s60 = sphi 0, %s44
      %s64 = sphi 0, %s64
      %s66 = sphi 0, %s64
      %s67 = sphi 0, %s66
      %s81 = sphi 0, %s67
      %s85 = sphi 0, %s85
      %s87 = sphi 0, %s85
      %s88 = sphi 0, %s87
      %s102 = sphi 0, %s88
      %s110 = sphi 0, %s112
      %s113 = sphi 0, %s110
      %s114 = sphi 0, %s113
      %s130 = sphi 0, %s114
    $region4: #{tpu_custom_call.1} parent=1 // loop_header_branch
      %19 = sbr.rel (%p17) target = $region8
    $region5: #{tpu_custom_call.1} parent=1 // loop_body
      %s21 = ssub.s32 %s16, 1
      %s22 = ssub.s32 %s16, 2
      %s29 = sadd.s32 1, %s24
      %p30 = scmp.ge.s32.totalorder %s29, 1
      %s31 = scalar_select %p30, 0, %s29
      %s32 = sadd.s32 1, %s23
      %s33 = scalar_select %p30, %s32, %s23
      %p34 = scmp.ge.s32.totalorder %s33, 2
      %s35 = scalar_select %p34, 0, %s33
      %s36 = ssub.s32 %s23, %s35
      %s37 = ssub.s32 %s24, %s31
      %s38 = sor.u32 %s36, %s37
      %p39 = scmp.eq.s32.totalorder %s38, 0
      %s41 = sadd.s32 %s40, 1
      %s42 = scalar_select %p39, %s40, %s41
      %p45 = pneg %p39
      %p46 = scmp.eq.s32.totalorder %s16, 1
      %p47 = por %p45, %p46
      %p48 = scmp.ne.s32.totalorder %s40, %s43
      %p49 = scmp.eq.s32.totalorder %s16, 0
      %p50 = por %p48, %p49
      %p51 = scmp.ne.s32.totalorder %s40, %s43
      %p52 = scmp.eq.s32.totalorder %s21, 1
      %p53 = por %p51, %p52
      %p54 = scmp.ne.s32.totalorder %s43, %s44
      %p55 = scmp.eq.s32.totalorder %s21, 0
      %p56 = por %p54, %p55
      %p57 = scmp.ne.s32.totalorder %s43, %s44
      %p58 = scmp.eq.s32.totalorder %s22, 1
      %p59 = por %p57, %p58
      %p61 = scmp.ne.s32.totalorder %s44, %s60
      %p62 = scmp.eq.s32.totalorder %s22, 0
      %p63 = por %p61, %p62
      %s65 = sadd.s32 %s64, 1
      %p68 = scmp.eq.s32.totalorder %s16, 1
      %p69 = scmp.ne.s32.totalorder %s64, %s66
      %p70 = scmp.eq.s32.totalorder %s16, 0
      %p71 = por %p69, %p70
      %p72 = scmp.ne.s32.totalorder %s64, %s66
      %p73 = scmp.eq.s32.totalorder %s21, 1
      %p74 = por %p72, %p73
      %p75 = scmp.ne.s32.totalorder %s66, %s67
      %p76 = scmp.eq.s32.totalorder %s21, 0
      %p77 = por %p75, %p76
      %p78 = scmp.ne.s32.totalorder %s66, %s67
      %p79 = scmp.eq.s32.totalorder %s22, 1
      %p80 = por %p78, %p79
      %p82 = scmp.ne.s32.totalorder %s67, %s81
      %p83 = scmp.eq.s32.totalorder %s22, 0
      %p84 = por %p82, %p83
      %s86 = sadd.s32 %s85, 1
      %p89 = scmp.eq.s32.totalorder %s16, 1
      %p90 = scmp.ne.s32.totalorder %s85, %s87
      %p91 = scmp.eq.s32.totalorder %s16, 0
      %p92 = por %p90, %p91
      %p93 = scmp.ne.s32.totalorder %s85, %s87
      %p94 = scmp.eq.s32.totalorder %s21, 1
      %p95 = por %p93, %p94
      %p96 = scmp.ne.s32.totalorder %s87, %s88
      %p97 = scmp.eq.s32.totalorder %s21, 0
      %p98 = por %p96, %p97
      %p99 = scmp.ne.s32.totalorder %s87, %s88
      %p100 = scmp.eq.s32.totalorder %s22, 1
      %p101 = por %p99, %p100
      %p103 = scmp.ne.s32.totalorder %s88, %s102
      %p104 = scmp.eq.s32.totalorder %s22, 0
      %p105 = por %p103, %p104
      %s106 = ssub.s32 %s23, %s35
      %s107 = ssub.s32 %s24, %s31
      %s108 = sor.u32 %s106, %s107
      %p109 = scmp.eq.s32.totalorder %s108, 0
      %s111 = sadd.s32 %s110, 1
      %s112 = scalar_select %p109, %s110, %s111
      %p115 = pneg %p109
      %p116 = scmp.eq.s32.totalorder %s16, 1
      %p117 = por %p115, %p116
      %p118 = scmp.ne.s32.totalorder %s110, %s113
      %p119 = scmp.eq.s32.totalorder %s16, 0
      %p120 = por %p118, %p119
      %p121 = scmp.ne.s32.totalorder %s110, %s113
      %p122 = scmp.eq.s32.totalorder %s21, 1
      %p123 = por %p121, %p122
      %p124 = scmp.ne.s32.totalorder %s113, %s114
      %p125 = scmp.eq.s32.totalorder %s21, 0
      %p126 = por %p124, %p125
      %p127 = scmp.ne.s32.totalorder %s113, %s114
      %p128 = scmp.eq.s32.totalorder %s22, 1
      %p129 = por %p127, %p128
      %p131 = scmp.ne.s32.totalorder %s114, %s130
      %p132 = scmp.eq.s32.totalorder %s22, 0
      %p133 = por %p131, %p132
      %p134 = scmp.le.s32.totalorder 1, %s16
      %p135 = scmp.lt.s32.totalorder %s16, 3
      %p136 = pnand %p134, %p135
      %p137 = pneg %p136
      // Predicated region
      $region9: #{tpu_custom_call.1} parent=5 // pred_check
        _
      $region10: #{tpu_custom_call.1} parent=5 // pred_check_branch
        %139 = sbr.rel (%p136) target = $region12
      $region11: #{tpu_custom_call.1} parent=5 // pred_region
        %s140 = ssub.s32 %s16, 1
        // Predicated region
        $region13: #{tpu_custom_call.1} parent=11 // pred_check
          %p141 = pneg %p77
        $region14: #{tpu_custom_call.1} parent=11 // pred_check_branch
          %143 = sbr.rel (%p141) target = $region16
        $region15: #{tpu_custom_call.1} parent=11 // pred_region
          %s145 = ssub.s32 1024, 1024
          %146 = vsyncadd [#allocation6], %s145
          %s147 = sshll.u32 [#allocation5], 4
          %s148 = int_to_ptr.vmem [resolvable:$true] %s147
          %153 = dma.hbm_to_vmem [thread:$0]  %s1, 1024, %s148, [#allocation6], 64, 64, 4
        $region16: #{tpu_custom_call.1} parent=11 // pred_fallthru
          _
        // Predicated region
        $region17: #{tpu_custom_call.1} parent=11 // pred_check
          %p154 = pneg %p98
        $region18: #{tpu_custom_call.1} parent=11 // pred_check_branch
          %156 = sbr.rel (%p154) target = $region20
        $region19: #{tpu_custom_call.1} parent=11 // pred_region
          _
        $region20: #{tpu_custom_call.1} parent=11 // pred_fallthru
          _
      $region12: #{tpu_custom_call.1} parent=5 // pred_fallthru
        _
      %p157 = scmp.lt.s32.totalorder %s16, 2
      // Predicated region
      $region21: #{tpu_custom_call.1} parent=5 // pred_check
        %p158 = pneg %p157
      $region22: #{tpu_custom_call.1} parent=5 // pred_check_branch
        %160 = sbr.rel (%p158) target = $region24
      $region23: #{tpu_custom_call.1} parent=5 // pred_region
        // Predicated region
        $region25: #{tpu_custom_call.1} parent=23 // pred_check
          %p161 = pneg %p50
        $region26: #{tpu_custom_call.1} parent=23 // pred_check_branch
          %163 = sbr.rel (%p161) target = $region28
        $region27: #{tpu_custom_call.1} parent=23 // pred_region
          %s164 = sand.u32 %s40, 1
          %s165 = scalar_lea.sflag [#allocation3], %s164
          %s166 = sand.u32 %s40, 1
          %s167 = smul.addr %s166, 32
          %s168 = scalar_lea.vmem [#allocation2], %s167
          %s169 = smul.u32 8, %s24
          %s171 = ssub.s32 512, 512
          %172 = vsyncadd %s165, %s171
          %s173 = smul.addr %s23, 8
          %s174 = sadd.s32 %s169, %s173
          %s175 = smul.addr %s174, 64
          %s176 = scalar_lea.hbm %s0, %s175
          %s177 = sshll.u32 %s168, 4
          %s178 = int_to_ptr.vmem [resolvable:$true] %s177
          %183 = dma.hbm_to_vmem [thread:$0]  %s176, 512, %s178, %s165, 64, 64, 4
        $region28: #{tpu_custom_call.1} parent=23 // pred_fallthru
          _
      $region24: #{tpu_custom_call.1} parent=5 // pred_fallthru
        _
      %p184 = scmp.le.s32.totalorder 1, %s16
      %p185 = scmp.lt.s32.totalorder %s16, 3
      %p186 = pnand %p184, %p185
      %p187 = pneg %p186
      // Predicated region
      $region29: #{tpu_custom_call.1} parent=5 // pred_check
        _
      $region30: #{tpu_custom_call.1} parent=5 // pred_check_branch
        %189 = sbr.rel (%p186) target = $region32
      $region31: #{tpu_custom_call.1} parent=5 // pred_region
        %s190 = ssub.s32 %s16, 1
        %s191 = sand.u32 %s43, 1
        %s192 = scalar_lea.sflag [#allocation3], %s191
        %s193 = sand.u32 %s43, 1
        %s194 = smul.addr %s193, 32
        %s195 = scalar_lea.vmem [#allocation2], %s194
        // Predicated region
        $region33: #{tpu_custom_call.1} parent=31 // pred_check
          %p196 = pneg %p56
        $region34: #{tpu_custom_call.1} parent=31 // pred_check_branch
          %198 = sbr.rel (%p196) target = $region36
        $region35: #{tpu_custom_call.1} parent=31 // pred_region
          %199 = dma.done %s192, 512
        $region36: #{tpu_custom_call.1} parent=31 // pred_fallthru
          _
        // Predicated region
        $region37: #{tpu_custom_call.1} parent=31 // pred_check
          %p200 = pneg %p77
        $region38: #{tpu_custom_call.1} parent=31 // pred_check_branch
          %202 = sbr.rel (%p200) target = $region40
        $region39: #{tpu_custom_call.1} parent=31 // pred_region
          %203 = dma.done [#allocation6], 1024
        $region40: #{tpu_custom_call.1} parent=31 // pred_fallthru
          _
        %s204 = sand.u32 %s43, 1
        %s205 = scalar_lea.sflag [#allocation3], %s204
        %s206 = sand.u32 %s43, 1
        %s207 = smul.addr %s206, 32
        %s208 = scalar_lea.vmem [#allocation2], %s207
        %p209 = pneg %p56
        %p210 = pneg %p53
        %p211 = pneg %p77
        %p212 = pneg %p74
        %p213 = pneg %p98
        %p214 = pneg %p95
        %p215 = pneg %p126
        %p216 = pneg %p123
        %s217 = sand.u32 %s113, 1
        %s218 = scalar_lea.sflag [#allocation4], %s217
        %s219 = sand.u32 %s113, 1
        %s220 = smul.addr %s219, 32
        %s221 = scalar_lea.vmem [#allocation7], %s220
        %s222 = smul.u32 8, %s26
        %s223 = smul.u32 8, %s26
        %v225 = vld [vmem:[%s195] sm:$0xf]
        %v226 = vld [vmem:[%s195 + $0x4] sm:$0xf]
        %v227 = vld [vmem:[%s195 + $0x8] sm:$0xf]
        %v228 = vld [vmem:[%s195 + $0xc] sm:$0xf]
        %v229 = vld [vmem:[%s195 + $0x10] sm:$0xf]
        %v230 = vld [vmem:[%s195 + $0x14] sm:$0xf]
        %v231 = vld [vmem:[%s195 + $0x18] sm:$0xf]
        %v232 = vld [vmem:[%s195 + $0x1c] sm:$0xf]
        %v233 = vld [vmem:[#allocation5] sm:$0xf]
        %v234 = vld [vmem:[#allocation5 + $0x4] sm:$0xf]
        %v235 = vld [vmem:[#allocation5 + $0x8] sm:$0xf]
        %v236 = vld [vmem:[#allocation5 + $0xc] sm:$0xf]
        %v237 = vld [vmem:[#allocation5 + $0x10] sm:$0xf]
        %v238 = vld [vmem:[#allocation5 + $0x14] sm:$0xf]
        %v239 = vld [vmem:[#allocation5 + $0x18] sm:$0xf]
        %v240 = vld [vmem:[#allocation5 + $0x1c] sm:$0xf]
        %v241 = vld [vmem:[#allocation5 + $0x20] sm:$0xf]
        %v242 = vld [vmem:[#allocation5 + $0x24] sm:$0xf]
        %v243 = vld [vmem:[#allocation5 + $0x28] sm:$0xf]
        %v244 = vld [vmem:[#allocation5 + $0x2c] sm:$0xf]
        %v245 = vld [vmem:[#allocation5 + $0x30] sm:$0xf]
        %v246 = vld [vmem:[#allocation5 + $0x34] sm:$0xf]
        %v247 = vld [vmem:[#allocation5 + $0x38] sm:$0xf]
        %v248 = vld [vmem:[#allocation5 + $0x3c] sm:$0xf]
        %v249 = vld [vmem:[%s2] sm:$0x1]
        %v251 = vlaneseq
        %v252 = vshrl.u32 %v251, 7
        %v253 = vsub.s32 0, %v252
        %v254 = vrot.slane %v249, %v253
        %v264 = vunpack.c.l.b16 %v225
        %v265 = vunpack.c.l.b16 %v226
        %v266 = vunpack.c.l.b16 %v227
        %v267 = vunpack.c.l.b16 %v228
        %v268 = vunpack.c.l.b16 %v229
        %v269 = vunpack.c.l.b16 %v230
        %v270 = vunpack.c.l.b16 %v231
        %v271 = vunpack.c.l.b16 %v232
        %v272 = vpack.c.b16 %v265, %v264
        %v273 = vpack.c.b16 %v267, %v266
        %v274 = vpack.c.b16 %v269, %v268
        %v275 = vpack.c.b16 %v271, %v270
        %v296 = vunpack.c.l.b16 %v233
        %v297 = vunpack.c.l.b16 %v234
        %v298 = vunpack.c.l.b16 %v235
        %v299 = vunpack.c.l.b16 %v236
        %v300 = vunpack.c.l.b16 %v237
        %v301 = vunpack.c.l.b16 %v238
        %v302 = vunpack.c.l.b16 %v239
        %v303 = vunpack.c.l.b16 %v240
        %v304 = vunpack.c.l.b16 %v241
        %v305 = vunpack.c.l.b16 %v242
        %v306 = vunpack.c.l.b16 %v243
        %v307 = vunpack.c.l.b16 %v244
        %v308 = vunpack.c.l.b16 %v245
        %v309 = vunpack.c.l.b16 %v246
        %v310 = vunpack.c.l.b16 %v247
        %v311 = vunpack.c.l.b16 %v248
        %v312 = vpack.c.b16 %v297, %v296
        %v313 = vpack.c.b16 %v299, %v298
        %v314 = vpack.c.b16 %v301, %v300
        %v315 = vpack.c.b16 %v303, %v302
        %v316 = vpack.c.b16 %v305, %v304
        %v317 = vpack.c.b16 %v307, %v306
        %v318 = vpack.c.b16 %v309, %v308
        %v319 = vpack.c.b16 %v311, %v310
        %328 = vmatprep.subr.bf16.mxu0 0
        %329 = vmatpush1.bf16.msra.mxu0 %v312
        %330 = vmatprep.subr.bf16.mxu0 0
        %331 = vmatpush1.bf16.msra.mxu0 %v313
        %332 = vmatprep.subr.bf16.mxu0 0
        %333 = vmatpush1.bf16.msra.mxu0 %v314
        %334 = vmatprep.subr.bf16.mxu0 0
        %335 = vmatpush1.bf16.msra.mxu0 %v315
        %336 = vmatprep.subr.bf16.mxu0 0
        %337 = vmatpush1.bf16.msra.mxu0 %v316
        %338 = vmatprep.subr.bf16.mxu0 0
        %339 = vmatpush1.bf16.msra.mxu0 %v317
        %340 = vmatprep.subr.bf16.mxu0 0
        %341 = vmatpush1.bf16.msra.mxu0 %v318
        %342 = vmatprep.subr.bf16.mxu0 0
        %343 = vmatpush1.bf16.msra.mxu0 %v319
        %344 = vmatprep.subr.bf16.mxu0 0
        %345 = vmatpush1.bf16.msra.mxu0 0
        %346 = vmatprep.subr.bf16.mxu0 0
        %347 = vmatpush1.bf16.msra.mxu0 0
        %348 = vmatprep.subr.bf16.mxu0 0
        %349 = vmatpush1.bf16.msra.mxu0 0
        %350 = vmatprep.subr.bf16.mxu0 0
        %351 = vmatpush1.bf16.msra.mxu0 0
        %352 = vmatprep.subr.bf16.mxu0 0
        %353 = vmatpush1.bf16.msra.mxu0 0
        %354 = vmatprep.subr.bf16.mxu0 0
        %355 = vmatpush1.bf16.msra.mxu0 0
        %356 = vmatprep.subr.bf16.mxu0 0
        %357 = vmatpush1.bf16.msra.mxu0 0
        %358 = vmatprep.subr.bf16.mxu0 0
        %359 = vmatpush1.bf16.msra.mxu0 0
        %360 = vmatprep.mubr.bf16.mxu0 0
        %361 = vmatmul.mubr.bf16.gmra.mrb[0].mxu0 %v272
        %v362 = vpop.f32.mrb[0].mxu0
        %v363 = vadd.f32 %v254, %v362
        %v364 = vpop.f32.mrb[0].mxu0
        %v365 = vpop.f32.mrb[0].mxu0
        %v366 = vadd.f32 %v254, %v365
        %v367 = vpop.f32.mrb[0].mxu0
        %368 = vmatprep.mubr.bf16.mxu0 0
        %369 = vmatmul.mubr.bf16.gmra.mrb[0].mxu0 %v273
        %v370 = vpop.f32.mrb[0].mxu0
        %v371 = vadd.f32 %v254, %v370
        %v372 = vpop.f32.mrb[0].mxu0
        %v373 = vpop.f32.mrb[0].mxu0
        %v374 = vadd.f32 %v254, %v373
        %v375 = vpop.f32.mrb[0].mxu0
        %376 = vmatprep.mubr.bf16.mxu0 0
        %377 = vmatmul.mubr.bf16.gmra.mrb[0].mxu0 %v274
        %v378 = vpop.f32.mrb[0].mxu0
        %v379 = vadd.f32 %v254, %v378
        %v380 = vpop.f32.mrb[0].mxu0
        %v381 = vpop.f32.mrb[0].mxu0
        %v382 = vadd.f32 %v254, %v381
        %v383 = vpop.f32.mrb[0].mxu0
        %384 = vmatprep.mubr.bf16.mxu0 0
        %385 = vmatmul.mubr.bf16.gmra.mrb[0].mxu0 %v275
        %v386 = vpop.f32.mrb[0].mxu0
        %v387 = vadd.f32 %v254, %v386
        %v388 = vpop.f32.mrb[0].mxu0
        %v389 = vpop.f32.mrb[0].mxu0
        %v390 = vadd.f32 %v254, %v389
        %v391 = vpop.f32.mrb[0].mxu0
        %392 = vdwg.mxu0
        %v393 = vmax.f32 %v363, 0.0
        %v394 = vmax.f32 %v366, 0.0
        %v395 = vmax.f32 %v371, 0.0
        %v396 = vmax.f32 %v374, 0.0
        %v397 = vmax.f32 %v379, 0.0
        %v398 = vmax.f32 %v382, 0.0
        %v399 = vmax.f32 %v387, 0.0
        %v400 = vmax.f32 %v390, 0.0
        %v401 = vpack.c.bf16 %v394, %v393
        %v402 = vpack.c.bf16 %v396, %v395
        %v403 = vpack.c.bf16 %v398, %v397
        %v404 = vpack.c.bf16 %v400, %v399
        %v409 = vunpack.c.l.b16 %v401
        %v410 = vunpack.c.h.b16 %v401
        %v411 = vunpack.c.l.b16 %v402
        %v412 = vunpack.c.h.b16 %v402
        %v413 = vunpack.c.l.b16 %v403
        %v414 = vunpack.c.h.b16 %v403
        %v415 = vunpack.c.l.b16 %v404
        %v416 = vunpack.c.h.b16 %v404
        %v417 = vpack.c.b16 %v409, %v409
        %v418 = vpack.c.b16 %v410, %v410
        %v419 = vpack.c.b16 %v411, %v411
        %v420 = vpack.c.b16 %v412, %v412
        %v421 = vpack.c.b16 %v413, %v413
        %v422 = vpack.c.b16 %v414, %v414
        %v423 = vpack.c.b16 %v415, %v415
        %v424 = vpack.c.b16 %v416, %v416
        %433 = vst [vmem:[%s221] sm:$0xf] %v417
        %434 = vst [vmem:[%s221 + $0x4] sm:$0xf] %v418
        %435 = vst [vmem:[%s221 + $0x8] sm:$0xf] %v419
        %436 = vst [vmem:[%s221 + $0xc] sm:$0xf] %v420
        %437 = vst [vmem:[%s221 + $0x10] sm:$0xf] %v421
        %438 = vst [vmem:[%s221 + $0x14] sm:$0xf] %v422
        %439 = vst [vmem:[%s221 + $0x18] sm:$0xf] %v423
        %440 = vst [vmem:[%s221 + $0x1c] sm:$0xf] %v424
        %s441 = sand.u32 %s113, 1
        %s442 = scalar_lea.sflag [#allocation4], %s441
        %s443 = sand.u32 %s113, 1
        %s444 = smul.addr %s443, 32
        %s445 = scalar_lea.vmem [#allocation7], %s444
        // Predicated region
        $region41: #{tpu_custom_call.1} parent=31 // pred_check
          %p446 = pneg %p123
        $region42: #{tpu_custom_call.1} parent=31 // pred_check_branch
          %448 = sbr.rel (%p446) target = $region44
        $region43: #{tpu_custom_call.1} parent=31 // pred_region
          %s449 = smul.u32 8, %s26
          %s451 = ssub.s32 512, 512
          %452 = vsyncadd %s442, %s451
          %s453 = smul.addr %s25, 8
          %s454 = sadd.s32 %s449, %s453
          %s455 = smul.addr %s454, 64
          %s456 = scalar_lea.hbm %s3, %s455
          %s457 = sshll.u32 %s445, 4
          %s458 = int_to_ptr.vmem [resolvable:$true] %s457
          %463 = dma.vmem_to_hbm [thread:$0]  %s458, 512, %s456, %s442, 64, 64, 4
        $region44: #{tpu_custom_call.1} parent=31 // pred_fallthru
          _
      $region32: #{tpu_custom_call.1} parent=5 // pred_fallthru
        _
      %p464 = scmp.le.s32.totalorder 2, %s16
      // Predicated region
      $region45: #{tpu_custom_call.1} parent=5 // pred_check
        %p465 = pneg %p464
      $region46: #{tpu_custom_call.1} parent=5 // pred_check_branch
        %467 = sbr.rel (%p465) target = $region48
      $region47: #{tpu_custom_call.1} parent=5 // pred_region
        %s468 = ssub.s32 %s16, 2
        // Predicated region
        $region49: #{tpu_custom_call.1} parent=47 // pred_check
          %p469 = pneg %p129
        $region50: #{tpu_custom_call.1} parent=47 // pred_check_branch
          %471 = sbr.rel (%p469) target = $region52
        $region51: #{tpu_custom_call.1} parent=47 // pred_region
          %s472 = sand.u32 %s114, 1
          %s473 = scalar_lea.sflag [#allocation4], %s472
          %s474 = sand.u32 %s114, 1
          %s475 = smul.addr %s474, 32
          %s476 = scalar_lea.vmem [#allocation7], %s475
          %477 = dma.done %s473, 512
        $region52: #{tpu_custom_call.1} parent=47 // pred_fallthru
          _
      $region48: #{tpu_custom_call.1} parent=5 // pred_fallthru
        _
    $region6: #{tpu_custom_call.1} parent=1 // loop_footer
      %s20 = sadd.s32 1, %s16
    $region7: #{tpu_custom_call.1} parent=1 // loop_footer_branch
      %15 = sbr.rel target = $region3
    $region8: #{tpu_custom_call.1} parent=1 // loop_exit
      _
    %478 = vsyncpa [#allocation3], 1
    %s479 = scalar_lea.sflag [#allocation3], 1
    %480 = vsyncpa %s479, 1
    %481 = vsyncpa [#allocation6], 1
    %482 = vsyncpa [#allocation4], 1
    %s483 = scalar_lea.sflag [#allocation4], 1
    %484 = vsyncpa %s483, 1

</llo_original>
